<compile_context>
chip_gen: v6e
topology: v6e:2x2x1
jax: 0.10.0
libtpu: 0.0.40
codegen_flags: <defaults>
</compile_context>

<pallas_src>
import jax
import jax.numpy as jnp
from jax.experimental import pallas as pl
from jax.experimental.pallas import tpu as pltpu

_LANES = 128
_NEG_BIG = -1e30  # sigmoid(_NEG_BIG) == 0.0 exactly (also -inf after bf16 cast)


def _round_up(x: int, m: int) -> int:
    return ((x + m - 1) // m) * m


def _chip_traits():
    """Return (two_tensorcores, vmem_limit_bytes, live_vmem_budget_bytes)."""
    kind = ""
    try:
        dev = jax.devices()[0]
        if dev.platform == "tpu":
            kind = dev.device_kind.lower()
    except Exception:
        pass
    is_v7 = "v7" in kind
    two_tc = is_v7 or ("v4" in kind) or ("v5p" in kind)
    if is_v7 or not kind:
        # v7x has only 64 MiB VMEM per TensorCore -> conservative budget.
        # (Unknown chip falls back to the conservative setting too.)
        return two_tc, 32 * 1024 * 1024, 24 * 1024 * 1024
    # v5e / v6e (and v4/v5p): 128 MiB physical VMEM -> bigger tiles, fewer
    # grid steps (~0.35 us fixed overhead per step).
    return two_tc, 64 * 1024 * 1024, 48 * 1024 * 1024


def dice_loss_pallas(pred, target, *, eps: float = 1e-3, loss_weight: float = 1.0):
    """Pallas equivalent of DiceLoss.forward for Tensor inputs.

    pred:   (N, 1, H, W) logits (f32 or bf16 -- bf16 halves HBM traffic)
    target: (N, H, W) or (N, 1, H, W) segmentation map (native dtype is read
            directly; no wrapper-side cast)
    returns: scalar f32 loss  (loss_weight * mean_n(1 - dice_n))
    """
    if target.ndim == 3:
        target = target[:, None, :, :]
    assert pred.shape == target.shape, (pred.shape, target.shape)

    n = pred.shape[0]
    f = 1
    for d in pred.shape[1:]:
        f *= d

    two_tc, vmem_limit, budget = _chip_traits()

    pred_bytes = jnp.dtype(pred.dtype).itemsize
    tgt_bytes = jnp.dtype(target.dtype).itemsize

    f_pad = _round_up(f, _LANES)
    rows = f_pad // _LANES

    # Tile sizing: 2 double-buffered input tiles + ~3 f32 tile-sized
    # intermediates (sigmoid(p), t, p*t) must fit the live-VMEM budget.
    per_row_live = n * _LANES * (2 * (pred_bytes + tgt_bytes) + 12)
    max_tile_rows = max(16, min((budget // per_row_live) // 16 * 16, 2048))

    if rows <= max_tile_rows:
        tile_rows = rows           # single tile; block dim == full array dim
        num_tiles = 1
    else:
        tile_rows = max_tile_rows  # multiple of 16 -> dense sublane tiles
        num_tiles = pl.cdiv(rows, tile_rows)

    # Megacore split: only on 2-TensorCore chips, whenever there is work to
    # share.  On 1-TC chips the split axis stays size 1 (no wasted DMA).
    num_splits = 2 if (two_tc and num_tiles >= 2) else 1
    tiles_per_split = pl.cdiv(num_tiles, num_splits)
    last_tile = num_tiles - 1

    # Lane-dense (N, rows, 128) view.  No row padding; only f % 128 != 0 pays
    # a lane pad (pred pad -> sigmoid==0, target pad -> 0).
    pred2 = pred.reshape(n, f)
    tgt2 = target.reshape(n, f)
    lane_pad = f_pad - f
    if lane_pad:
        pred2 = jnp.pad(pred2, ((0, 0), (0, lane_pad)), constant_values=_NEG_BIG)
        tgt2 = jnp.pad(tgt2, ((0, 0), (0, lane_pad)), constant_values=0)
    pred3 = pred2.reshape(n, rows, _LANES)
    tgt3 = tgt2.reshape(n, rows, _LANES)  # native dtype, upcast in-kernel

    def kernel(pred_ref, tgt_ref, acc_ref):
        s = pl.program_id(0)
        k = pl.program_id(1)

        @pl.when(k == 0)
        def _():
            acc_ref[...] = jnp.zeros_like(acc_ref)

        # Global row offset of this logical tile.  Rows >= `rows` (ragged last
        # tile, or an extra clamped split step) are masked to 0 -- required
        # because out-of-bounds block contents are unspecified.
        tile_idx = s * tiles_per_split + k
        row0 = tile_idx * tile_rows
        rid = jax.lax.broadcasted_iota(jnp.int32, (tile_rows, _LANES), 0) + row0
        valid = rid < rows  # (tile_rows, 128)

        p = jax.nn.sigmoid(pred_ref[...].astype(jnp.float32))  # EUP
        t = tgt_ref[...].astype(jnp.float32)
        p = jnp.where(valid[None], p, 0.0)
        t = jnp.where(valid[None], t, 0.0)

        # Reduce only over the sublane (row) axis per step; the cross-lane
        # reduce + dice ratio are a tiny wrapper epilogue.
        acc_ref[0, 0] += jnp.sum(p * t, axis=1)  # intersection partials (N,128)
        acc_ref[0, 1] += jnp.sum(p, axis=1)      # pred cardinality partials
        acc_ref[0, 2] += jnp.sum(t, axis=1)      # target cardinality partials

    def in_map(s, k):
        # Clamp so an odd tile count split across 2 TCs never indexes a
        # fully out-of-bounds block (the row mask zeroes its contribution).
        t_idx = jnp.minimum(s * tiles_per_split + k, last_tile)
        return (0, t_idx, 0)

    def out_map(s, k):
        return (s, 0, 0, 0)

    in_elems = n * rows * _LANES
    cost = pl.CostEstimate(
        flops=5 * in_elems,
        transcendentals=in_elems,
        bytes_accessed=in_elems * (pred_bytes + tgt_bytes)
        + num_splits * 3 * n * _LANES * 4,
    )

    partials = pl.pallas_call(
        kernel,
        out_shape=jax.ShapeDtypeStruct((num_splits, 3, n, _LANES), jnp.float32),
        grid_spec=pl.GridSpec(
            grid=(num_splits, tiles_per_split),
            in_specs=[
                pl.BlockSpec((n, tile_rows, _LANES), in_map),
                pl.BlockSpec((n, tile_rows, _LANES), in_map),
            ],
            out_specs=pl.BlockSpec((1, 3, n, _LANES), out_map),
        ),
        compiler_params=pltpu.CompilerParams(
            dimension_semantics=("parallel", "arbitrary"),
            vmem_limit_bytes=vmem_limit,
        ),
        cost_estimate=cost,
    )(pred3, tgt3)

    # Tiny epilogue: fold splits + lanes, dice ratio, 'mean' reduction.
    sums = jnp.sum(partials, axis=(0, 3))  # (3, N)
    intersection, pred_card, target_card = sums[0], sums[1], sums[2]
    dice = (2.0 * intersection + eps) / (pred_card + target_card + eps)
    loss = 1.0 - dice  # (N,)
    # reduction='mean', weight=None, avg_factor=None -> simple mean over N.
    return loss_weight * jnp.mean(loss)


def _dice_loss_reference(pred, target, eps=1e-3, loss_weight=1.0):
    """Pure-JAX reference mirroring the PyTorch dice_loss + 'mean' reduction."""
    if target.ndim == 3:
        target = target[:, None, :, :]
    p = jax.nn.sigmoid(pred.astype(jnp.float32))
    t = target.astype(jnp.float32)
    inter = jnp.sum(p * t, axis=(1, 2, 3))
    pc = jnp.sum(p, axis=(1, 2, 3))
    tc = jnp.sum(t, axis=(1, 2, 3))
    dice = (2.0 * inter + eps) / (pc + tc + eps)
    return loss_weight * jnp.mean(1.0 - dice)


# TODO(synk): the list-of-tensors branch of DiceLoss.forward, per-sample
# `weight`, avg_factor, and reduction overrides are not implemented (module
# defaults: weight=None, reduction='mean', avg_factor=None).

if __name__ == "__main__":
    key = jax.random.PRNGKey(0)
    k1, k2 = jax.random.split(key)

    N, C, H, W = 2, 1, 16, 16
    pred = jax.random.normal(k1, (N, C, H, W), dtype=jnp.float32)  # logits
    # binary segmentation target, shape (N, H, W) (3-D branch of forward)
    target = (jax.random.uniform(k2, (N, H, W)) > 0.5).astype(jnp.float32)

    loss = dice_loss_pallas(pred, target, eps=1e-3, loss_weight=1.0)
    loss = jax.block_until_ready(loss)

    ref = _dice_loss_reference(pred, target, eps=1e-3, loss_weight=1.0)
    assert jnp.allclose(loss, ref, atol=1e-5, rtol=1e-5), (loss, ref)

    print("KERNEL_OK")
</pallas_src>

<mosaic_0001>
module attributes {stable_mosaic.version = 11 : i64} {
  func.func @kernel(%arg0: i32, %arg1: i32, %arg2: memref<2x2x128xf32, #tpu.memory_space<vmem>>, %arg3: memref<2x2x128xf32, #tpu.memory_space<vmem>>, %arg4: memref<1x3x2x128xf32, #tpu.memory_space<vmem>>) attributes {dimension_semantics = [#tpu.dimension_semantics<parallel>, #tpu.dimension_semantics<arbitrary>], iteration_bounds = array<i64: 1, 1>, scalar_prefetch = 0 : i64, scratch_operands = 0 : i64, tpu.core_type = #tpu.core_type<tc>, window_params = [{transform_indices = @transform_0, window_bounds = array<i64: 2, 2, 128>}, {transform_indices = @transform_1, window_bounds = array<i64: 2, 2, 128>}, {transform_indices = @transform_2, window_bounds = array<i64: 1, 3, 2, 128>}]} {
    %c0_i32 = arith.constant 0 : i32
    %0 = arith.cmpi eq, %arg1, %c0_i32 : i32
    %1 = arith.extui %0 : i1 to i32
    %c0_i32_0 = arith.constant 0 : i32
    %2 = arith.cmpi ne, %1, %c0_i32_0 : i32
    scf.if %2 {
      %cst_34 = arith.constant 0.000000e+00 : f32
      %50 = vector.broadcast %cst_34 : f32 to vector<1x3x2x128xf32>
      %c0_35 = arith.constant 0 : index
      %c0_36 = arith.constant 0 : index
      %c0_37 = arith.constant 0 : index
      %c0_38 = arith.constant 0 : index
      %51 = vector.load %arg4[%c0_35, %c0_36, %c0_37, %c0_38] : memref<1x3x2x128xf32, #tpu.memory_space<vmem>>, vector<1x3x2x128xf32>
      tpu.vector_store %arg4[%c0_35, %c0_36, %c0_37, %c0_38], %50 {strides = array<i32>} : memref<1x3x2x128xf32, #tpu.memory_space<vmem>>, vector<1x3x2x128xf32>,
    } else {
    }
    %c1_i32 = arith.constant 1 : i32
    %3 = arith.muli %arg0, %c1_i32 : i32
    %4 = arith.addi %3, %arg1 : i32
    %c2_i32 = arith.constant 2 : i32
    %5 = arith.muli %4, %c2_i32 : i32
    %6 = tpu.iota {dimensions = array<i32: 0>} : vector<2x128xi32>
    %7 = vector.broadcast %5 : i32 to vector<2x128xi32>
    %8 = arith.addi %6, %7 : vector<2x128xi32>
    %c2_i32_1 = arith.constant 2 : i32
    %9 = vector.broadcast %c2_i32_1 : i32 to vector<2x128xi32>
    %10 = arith.cmpi slt, %8, %9 : vector<2x128xi32>
    %c0 = arith.constant 0 : index
    %c0_2 = arith.constant 0 : index
    %c0_3 = arith.constant 0 : index
    %11 = vector.load %arg2[%c0, %c0_2, %c0_3] : memref<2x2x128xf32, #tpu.memory_space<vmem>>, vector<2x2x128xf32>
    %12 = arith.negf %11 : vector<2x2x128xf32>
    %13 = math.exp %12 : vector<2x2x128xf32>
    %cst = arith.constant 1.000000e+00 : f32
    %14 = vector.broadcast %cst : f32 to vector<2x2x128xf32>
    %15 = arith.addf %14, %13 : vector<2x2x128xf32>
    %16 = arith.divf %14, %15 : vector<2x2x128xf32>
    %c0_4 = arith.constant 0 : index
    %c0_5 = arith.constant 0 : index
    %c0_6 = arith.constant 0 : index
    %17 = vector.load %arg3[%c0_4, %c0_5, %c0_6] : memref<2x2x128xf32, #tpu.memory_space<vmem>>, vector<2x2x128xf32>
    %18 = vector.shape_cast %10 : vector<2x128xi1> to vector<1x2x128xi1>
    %cst_7 = arith.constant 0.000000e+00 : f32
    %19 = vector.shape_cast %18 : vector<1x2x128xi1> to vector<1x2x128xi1>
    %20 = vector.broadcast %19 : vector<1x2x128xi1> to vector<2x2x128xi1>
    %21 = vector.broadcast %cst_7 : f32 to vector<2x2x128xf32>
    %22 = arith.select %20, %16, %21 : vector<2x2x128xi1>, vector<2x2x128xf32>
    %23 = vector.shape_cast %10 : vector<2x128xi1> to vector<1x2x128xi1>
    %cst_8 = arith.constant 0.000000e+00 : f32
    %24 = vector.shape_cast %23 : vector<1x2x128xi1> to vector<1x2x128xi1>
    %25 = vector.broadcast %24 : vector<1x2x128xi1> to vector<2x2x128xi1>
    %26 = vector.broadcast %cst_8 : f32 to vector<2x2x128xf32>
    %27 = arith.select %25, %17, %26 : vector<2x2x128xi1>, vector<2x2x128xf32>
    %c0_9 = arith.constant 0 : index
    %c0_10 = arith.constant 0 : index
    %c0_11 = arith.constant 0 : index
    %c0_12 = arith.constant 0 : index
    %28 = vector.load %arg4[%c0_9, %c0_10, %c0_11, %c0_12] : memref<1x3x2x128xf32, #tpu.memory_space<vmem>>, vector<1x1x2x128xf32>
    %29 = vector.shape_cast %28 : vector<1x1x2x128xf32> to vector<2x128xf32>
    %30 = arith.mulf %22, %27 : vector<2x2x128xf32>
    %cst_13 = arith.constant dense<0.000000e+00> : vector<2x128xf32>
    %31 = vector.multi_reduction <add>, %30, %cst_13 [1] : vector<2x2x128xf32> to vector<2x128xf32>
    %32 = arith.addf %29, %31 : vector<2x128xf32>
    %c0_14 = arith.constant 0 : index
    %c0_15 = arith.constant 0 : index
    %c0_16 = arith.constant 0 : index
    %c0_17 = arith.constant 0 : index
    %33 = vector.load %arg4[%c0_14, %c0_15, %c0_16, %c0_17] : memref<1x3x2x128xf32, #tpu.memory_space<vmem>>, vector<1x1x2x128xf32>
    %34 = vector.shape_cast %33 : vector<1x1x2x128xf32> to vector<2x128xf32>
    %35 = vector.shape_cast %32 : vector<2x128xf32> to vector<1x1x2x128xf32>
    tpu.vector_store %arg4[%c0_14, %c0_15, %c0_16, %c0_17], %35 {strides = array<i32>} : memref<1x3x2x128xf32, #tpu.memory_space<vmem>>, vector<1x1x2x128xf32>,
    %c0_18 = arith.constant 0 : index
    %c1 = arith.constant 1 : index
    %c0_19 = arith.constant 0 : index
    %c0_20 = arith.constant 0 : index
    %36 = vector.load %arg4[%c0_18, %c1, %c0_19, %c0_20] : memref<1x3x2x128xf32, #tpu.memory_space<vmem>>, vector<1x1x2x128xf32>
    %37 = vector.shape_cast %36 : vector<1x1x2x128xf32> to vector<2x128xf32>
    %cst_21 = arith.constant dense<0.000000e+00> : vector<2x128xf32>
    %38 = vector.multi_reduction <add>, %22, %cst_21 [1] : vector<2x2x128xf32> to vector<2x128xf32>
    %39 = arith.addf %37, %38 : vector<2x128xf32>
    %c0_22 = arith.constant 0 : index
    %c1_23 = arith.constant 1 : index
    %c0_24 = arith.constant 0 : index
    %c0_25 = arith.constant 0 : index
    %40 = vector.load %arg4[%c0_22, %c1_23, %c0_24, %c0_25] : memref<1x3x2x128xf32, #tpu.memory_space<vmem>>, vector<1x1x2x128xf32>
    %41 = vector.shape_cast %40 : vector<1x1x2x128xf32> to vector<2x128xf32>
    %42 = vector.shape_cast %39 : vector<2x128xf32> to vector<1x1x2x128xf32>
    tpu.vector_store %arg4[%c0_22, %c1_23, %c0_24, %c0_25], %42 {strides = array<i32>} : memref<1x3x2x128xf32, #tpu.memory_space<vmem>>, vector<1x1x2x128xf32>,
    %c0_26 = arith.constant 0 : index
    %c2 = arith.constant 2 : index
    %c0_27 = arith.constant 0 : index
    %c0_28 = arith.constant 0 : index
    %43 = vector.load %arg4[%c0_26, %c2, %c0_27, %c0_28] : memref<1x3x2x128xf32, #tpu.memory_space<vmem>>, vector<1x1x2x128xf32>
    %44 = vector.shape_cast %43 : vector<1x1x2x128xf32> to vector<2x128xf32>
    %cst_29 = arith.constant dense<0.000000e+00> : vector<2x128xf32>
    %45 = vector.multi_reduction <add>, %27, %cst_29 [1] : vector<2x2x128xf32> to vector<2x128xf32>
    %46 = arith.addf %44, %45 : vector<2x128xf32>
    %c0_30 = arith.constant 0 : index
    %c2_31 = arith.constant 2 : index
    %c0_32 = arith.constant 0 : index
    %c0_33 = arith.constant 0 : index
    %47 = vector.load %arg4[%c0_30, %c2_31, %c0_32, %c0_33] : memref<1x3x2x128xf32, #tpu.memory_space<vmem>>, vector<1x1x2x128xf32>
    %48 = vector.shape_cast %47 : vector<1x1x2x128xf32> to vector<2x128xf32>
    %49 = vector.shape_cast %46 : vector<2x128xf32> to vector<1x1x2x128xf32>
    tpu.vector_store %arg4[%c0_30, %c2_31, %c0_32, %c0_33], %49 {strides = array<i32>} : memref<1x3x2x128xf32, #tpu.memory_space<vmem>>, vector<1x1x2x128xf32>,
    return
  }
  func.func @transform_0(%arg0: i32, %arg1: i32) -> (i32, i32, i32) {
    %c1_i32 = arith.constant 1 : i32
    %0 = arith.muli %arg0, %c1_i32 : i32
    %1 = arith.addi %0, %arg1 : i32
    %c0_i32 = arith.constant 0 : i32
    %2 = arith.minsi %1, %c0_i32 : i32
    %c0_i32_0 = arith.constant 0 : i32
    %c0_i32_1 = arith.constant 0 : i32
    %c0_i32_2 = arith.constant 0 : i32
    return %c0_i32_0, %2, %c0_i32_1 : i32, i32, i32
  }
  func.func @transform_1(%arg0: i32, %arg1: i32) -> (i32, i32, i32) {
    %c1_i32 = arith.constant 1 : i32
    %0 = arith.muli %arg0, %c1_i32 : i32
    %1 = arith.addi %0, %arg1 : i32
    %c0_i32 = arith.constant 0 : i32
    %2 = arith.minsi %1, %c0_i32 : i32
    %c0_i32_0 = arith.constant 0 : i32
    %c0_i32_1 = arith.constant 0 : i32
    %c0_i32_2 = arith.constant 0 : i32
    return %c0_i32_0, %2, %c0_i32_1 : i32, i32, i32
  }
  func.func @transform_2(%arg0: i32, %arg1: i32) -> (i32, i32, i32, i32) {
    %c0_i32 = arith.constant 0 : i32
    %c0_i32_0 = arith.constant 0 : i32
    %c0_i32_1 = arith.constant 0 : i32
    %c0_i32_2 = arith.constant 0 : i32
    return %arg0, %c0_i32, %c0_i32_0, %c0_i32_1 : i32, i32, i32, i32
  }
}

</mosaic_0001>

<llo_original>
// kernel: tpu_custom_call.1
$region0: #{tpu_custom_call.1}
  #allocation0 [shape = 'u32[]', space=smem, size = 0x4, offset = 0x4, fixed_abs, tag = 'smem constant byte address 0x4 - core index']
  #allocation1 [shape = 'u32[144,128]{1,0:T(1,128)}', space=vmem, size = 0x12000, scoped, tag = 'internal scratch']
  %s0 = inlined_call_operand.hbm [shape: f32[2,2,128], index: 0, kind: input, shape index: {}]
  %s1 = inlined_call_operand.hbm [shape: f32[2,2,128], index: 1, kind: input, shape index: {}]
  %s2 = inlined_call_operand.hbm [shape: f32[1,3,2,128], index: 2, kind: output, shape index: {}]
  %s3 = sld [smem:[#allocation0]]
  $region30: #{tpu_custom_call.1} parent=0
    _
  %s5 = ssub.s32 1, %s3
  %s6 = scalar_select 0, %s5, %s3
  $region1: #{tpu_custom_call.1} parent=0
    #allocation2 [shape = 'u8[2048]{0}', space=vmem, size = 0x800, scoped, tag = 'input window, operand 0, single buffered']
    #allocation3 [shape = 's32[1]{0}', space=sflag, size = 0x4, scoped, tag = 'scoped memory for tpu_custom_call.1']
    #allocation4 [shape = 's32[1]{0}', space=sflag, size = 0x4, scoped, tag = 'scoped memory for tpu_custom_call.1']
    #allocation5 [shape = 'u8[2048]{0}', space=vmem, size = 0x800, scoped, tag = 'input window, operand 1, single buffered']
    #allocation6 [shape = 's32[1]{0}', space=sflag, size = 0x4, scoped, tag = 'scoped memory for tpu_custom_call.1']
    #allocation7 [shape = 'u8[3072]{0}', space=vmem, size = 0xc00, scoped, tag = 'output window, operand 0, single buffered']
    %7 = vsyncpa [#allocation3], 0
    %8 = vsyncpa [#allocation6], 0
    %9 = vsyncpa [#allocation4], 0
    // Predicated region
    $region2: #{tpu_custom_call.1} parent=1 // pred_check
      _
    $region3: #{tpu_custom_call.1} parent=1 // pred_check_branch
      %11 = sbr.rel (0) target = $region5
    $region4: #{tpu_custom_call.1} parent=1 // pred_region
      %s12 = sadd.s32 0, 0
      %p13 = scmp.lt.s32.totalorder %s12, 0
      %s14 = scalar_select %p13, %s12, 0
      %s16 = ssub.s32 64, 64
      %17 = vsyncadd [#allocation3], %s16
      %s18 = smul.addr %s14, 32
      %s19 = scalar_lea.hbm %s0, %s18
      %s20 = sshll.u32 [#allocation2], 4
      %s21 = int_to_ptr.vmem [resolvable:$true] %s20
      %26 = dma.hbm_to_vmem [thread:$0]  %s19, 64, %s21, [#allocation3], 32, 32, 2
    $region5: #{tpu_custom_call.1} parent=1 // pred_fallthru
      _
    // Predicated region
    $region6: #{tpu_custom_call.1} parent=1 // pred_check
      _
    $region7: #{tpu_custom_call.1} parent=1 // pred_check_branch
      %28 = sbr.rel (0) target = $region9
    $region8: #{tpu_custom_call.1} parent=1 // pred_region
      %s29 = sadd.s32 0, 0
      %p30 = scmp.lt.s32.totalorder %s29, 0
      %s31 = scalar_select %p30, %s29, 0
      %s33 = ssub.s32 64, 64
      %34 = vsyncadd [#allocation6], %s33
      %s35 = smul.addr %s31, 32
      %s36 = scalar_lea.hbm %s1, %s35
      %s37 = sshll.u32 [#allocation5], 4
      %s38 = int_to_ptr.vmem [resolvable:$true] %s37
      %43 = dma.hbm_to_vmem [thread:$0]  %s36, 64, %s38, [#allocation6], 32, 32, 2
    $region9: #{tpu_custom_call.1} parent=1 // pred_fallthru
      _
    // Predicated region
    $region10: #{tpu_custom_call.1} parent=1 // pred_check
      _
    $region11: #{tpu_custom_call.1} parent=1 // pred_check_branch
      %45 = sbr.rel (0) target = $region13
    $region12: #{tpu_custom_call.1} parent=1 // pred_region
      %46 = dma.done [#allocation3], 64
    $region13: #{tpu_custom_call.1} parent=1 // pred_fallthru
      _
    // Predicated region
    $region14: #{tpu_custom_call.1} parent=1 // pred_check
      _
    $region15: #{tpu_custom_call.1} parent=1 // pred_check_branch
      %48 = sbr.rel (0) target = $region17
    $region16: #{tpu_custom_call.1} parent=1 // pred_region
      %49 = dma.done [#allocation6], 64
    $region17: #{tpu_custom_call.1} parent=1 // pred_fallthru
      _
    %s50 = sadd.s32 0, 0
    %p51 = scmp.lt.s32.totalorder %s50, 0
    %s52 = scalar_select %p51, %s50, 0
    %s53 = sadd.s32 0, 0
    %p54 = scmp.lt.s32.totalorder %s53, 0
    %s55 = scalar_select %p54, %s53, 0
    %p56 = scmp.eq.s32.totalorder 0, 0
    // Predicated region
    $region18: #{tpu_custom_call.1} parent=1 // pred_check
      %p57 = pneg %p56
    $region19: #{tpu_custom_call.1} parent=1 // pred_check_branch
      %59 = sbr.rel (%p57) target = $region21
    $region20: #{tpu_custom_call.1} parent=1 // pred_region
      %60 = vst [vmem:[#allocation7] sm:$0x3] 0.0
      %61 = vst [vmem:[#allocation7 + $0x2] sm:$0x3] 0.0
      %62 = vst [vmem:[#allocation7 + $0x4] sm:$0x3] 0.0
    $region21: #{tpu_custom_call.1} parent=1 // pred_fallthru
      _
    %s63 = sadd.s32 0, 0
    %s64 = smul.u32 %s63, 2
    %v65 = vlaneseq
    %v66 = vshrl.u32 %v65, 7
    %v67 = vstv %s64
    %v68 = vadd.s32 %v66, %v67
    %vm69 = vcmp.lt.s32.totalorder %v68, 2
    %v70 = vld [vmem:[#allocation2] sm:$0x3]
    %v71 = vld [vmem:[#allocation2 + $0x2] sm:$0x3]
    %v72 = vxor.u32 %v70, 2147483648
    %v73 = vxor.u32 %v71, 2147483648
    %v74 = vmul.f32 %v72, 1.442695
    %v75 = vpow.pop %v74
    %v76 = vmul.f32 %v73, 1.442695
    %v77 = vpow.pop %v76
    %v78 = vadd.f32 %v75, 1.0
    %v79 = vadd.f32 %v77, 1.0
    %v80 = vrcp.pop %v78
    %v81 = vmul.f32 1.0, %v80
    %v82 = vrcp.pop %v79
    %v83 = vmul.f32 1.0, %v82
    %v84 = vld [vmem:[#allocation5] sm:$0x3]
    %v85 = vld [vmem:[#allocation5 + $0x2] sm:$0x3]
    %v86 = vsel %vm69, 1, 0
    %vm87 = vcmp.eq.s32.totalorder %v86, 1
    %v88 = vsel %vm87, %v81, 0.0
    %v89 = vsel %vm87, %v83, 0.0
    %v90 = vsel %vm87, %v84, 0.0
    %v91 = vsel %vm87, %v85, 0.0
    %v92 = vld [vmem:[#allocation7] sm:$0x3]
    %v93 = vmul.f32 %v88, %v90
    %v94 = vmul.f32 %v89, %v91
    %vm95 = vcmask 1041408
    %v96 = vsel %vm95, %v93, 0.0
    %v97 = vrot.slane %v96, 4
    %v98 = vadd.f32 %v96, %v97
    %v99 = vrot.slane %v98, 2
    %v100 = vadd.f32 %v98, %v99
    %v101 = vrot.slane %v100, 1
    %v102 = vadd.f32 %v100, %v101
    %v103 = vsel %vm95, %v94, 0.0
    %v104 = vrot.slane %v103, 4
    %v105 = vadd.f32 %v103, %v104
    %v106 = vrot.slane %v105, 2
    %v107 = vadd.f32 %v105, %v106
    %v108 = vrot.slane %v107, 1
    %v109 = vadd.f32 %v107, %v108
    %vm112 = vcmask 1041409
    %v113 = vsel %vm112, %v109, %v102
    %v115 = vadd.f32 %v92, %v113
    %116 = vst [vmem:[#allocation7] sm:$0x3] %v115
    %s117 = scalar_lea.vmem [#allocation7], 2
    %v118 = vld [vmem:[%s117] sm:$0x3]
    %v119 = vsel %vm95, %v88, 0.0
    %v120 = vrot.slane %v119, 4
    %v121 = vadd.f32 %v119, %v120
    %v122 = vrot.slane %v121, 2
    %v123 = vadd.f32 %v121, %v122
    %v124 = vrot.slane %v123, 1
    %v125 = vadd.f32 %v123, %v124
    %v126 = vsel %vm95, %v89, 0.0
    %v127 = vrot.slane %v126, 4
    %v128 = vadd.f32 %v126, %v127
    %v129 = vrot.slane %v128, 2
    %v130 = vadd.f32 %v128, %v129
    %v131 = vrot.slane %v130, 1
    %v132 = vadd.f32 %v130, %v131
    %v135 = vsel %vm112, %v132, %v125
    %v137 = vadd.f32 %v118, %v135
    %138 = vst [vmem:[%s117] sm:$0x3] %v137
    %s139 = scalar_lea.vmem [#allocation7], 4
    %v140 = vld [vmem:[%s139] sm:$0x3]
    %v141 = vsel %vm95, %v90, 0.0
    %v142 = vrot.slane %v141, 4
    %v143 = vadd.f32 %v141, %v142
    %v144 = vrot.slane %v143, 2
    %v145 = vadd.f32 %v143, %v144
    %v146 = vrot.slane %v145, 1
    %v147 = vadd.f32 %v145, %v146
    %v148 = vsel %vm95, %v91, 0.0
    %v149 = vrot.slane %v148, 4
    %v150 = vadd.f32 %v148, %v149
    %v151 = vrot.slane %v150, 2
    %v152 = vadd.f32 %v150, %v151
    %v153 = vrot.slane %v152, 1
    %v154 = vadd.f32 %v152, %v153
    %v157 = vsel %vm112, %v154, %v147
    %v159 = vadd.f32 %v140, %v157
    %160 = vst [vmem:[%s139] sm:$0x3] %v159
    // Predicated region
    $region22: #{tpu_custom_call.1} parent=1 // pred_check
      _
    $region23: #{tpu_custom_call.1} parent=1 // pred_check_branch
      %162 = sbr.rel (0) target = $region25
    $region24: #{tpu_custom_call.1} parent=1 // pred_region
      %s164 = ssub.s32 96, 96
      %165 = vsyncadd [#allocation4], %s164
      %s166 = sshll.u32 [#allocation7], 4
      %s167 = int_to_ptr.vmem [resolvable:$true] %s166
      %172 = dma.vmem_to_hbm [thread:$0]  %s167, 96, %s2, [#allocation4], 32, 32, 2
    $region25: #{tpu_custom_call.1} parent=1 // pred_fallthru
      _
    // Predicated region
    $region26: #{tpu_custom_call.1} parent=1 // pred_check
      _
    $region27: #{tpu_custom_call.1} parent=1 // pred_check_branch
      %174 = sbr.rel (0) target = $region29
    $region28: #{tpu_custom_call.1} parent=1 // pred_region
      %175 = dma.done [#allocation4], 96
    $region29: #{tpu_custom_call.1} parent=1 // pred_fallthru
      _
    %176 = vsyncpa [#allocation3], 1
    %177 = vsyncpa [#allocation6], 1
    %178 = vsyncpa [#allocation4], 1

</llo_original>
